<compile_context>
chip_gen: v5e
topology: v5e:2x2
jax: 0.10.0
libtpu: 0.0.40
codegen_flags: <defaults>
</compile_context>

<pallas_src>
import functools

import jax
import jax.numpy as jnp
from jax.experimental import pallas as pl
from jax.experimental.pallas import tpu as pltpu


def _round_up(x, m):
    return ((x + m - 1) // m) * m


def _num_tensorcores():
    """Best-effort TensorCore count of device 0 (v7x: 2, v5e/v6e: 1)."""
    try:
        dev = jax.devices()[0]
    except Exception:
        return 1
    for attr in ("num_cores", "core_count"):
        n = getattr(dev, attr, None)
        if isinstance(n, int) and n > 0:
            return n
    return 1  # safe fallback: behaves like a single-TC chip


def _choose_tile_m(rows, tm, num_tc, row_align):
    """Largest row tile <= tm (multiple of row_align).

    1 TC (v5e/v6e): take the biggest tile; extra grid steps are pure per-step
    overhead.  2 TCs (v7x): best-effort make the grid step count even (>=2) so
    the "parallel" grid axis splits evenly across both cores.
    """
    tm = max(row_align, (tm // row_align) * row_align)
    one_tile = min(tm, _round_up(rows, row_align))
    if num_tc < 2 or rows <= row_align:
        return one_tile
    max_g = min(pl.cdiv(rows, row_align), 1024)  # bounded trace-time search
    g = 2
    while g <= max_g:
        tile = _round_up(pl.cdiv(rows, g), row_align)
        if tile <= tm and pl.cdiv(rows, tile) % 2 == 0:
            return tile
        g += 2
    return one_tile  # no even split exists; fall back to the biggest tile


def _linear_kernel(x_ref, w_ref, b_ref, o_ref):
    # x_ref: (tm, Hp)  w_ref: (Hp, Op)  b_ref: (1, Op)  o_ref: (tm, Op)
    acc = jnp.dot(x_ref[...], w_ref[...], preferred_element_type=jnp.float32)
    o_ref[...] = (acc + b_ref[...]).astype(o_ref.dtype)


def pack_params(weight, bias, lanes=128):
    """One-time parameter packing (hoisted out of the per-call jitted forward).

    weight: (out_c, in_c) PyTorch nn.Linear layout; bias: (out_c,).
    Returns (w_blk, b_row): w_blk = kron(I_P, W^T) block-diagonal weight of
    shape (P*in_c, P*out_c) and the P-tiled bias row, where
    P = lanes // max(in_c, out_c) rows are folded into one lane-dense tile row.
    """
    out_c, in_c = weight.shape
    P = max(1, lanes // max(in_c, out_c))
    wt = jnp.asarray(weight).T  # (in_c, out_c)
    bias = jnp.asarray(bias)
    if P > 1:
        w_blk = jnp.kron(jnp.eye(P, dtype=wt.dtype), wt)  # (P*in_c, P*out_c)
        b_row = jnp.tile(bias, P).reshape(1, P * out_c)
    else:
        w_blk = wt
        b_row = bias.reshape(1, out_c)
    return w_blk, b_row


@functools.partial(jax.jit, static_argnames=("tm", "compute_dtype"))
def ffnn_t_forward(flow_x, w_blk, b_row, *, tm=4096, compute_dtype=None):
    """flow_x: [B, N, N, H];  (w_blk, b_row) from pack_params.
    Returns [B, N, N, out_c] (dtype = flow_x.dtype, or compute_dtype if set)."""
    B, N1, N2, H = flow_x.shape
    Hp, Op = w_blk.shape
    P = Hp // H
    out_c = Op // P
    assert Hp == P * H and Op == P * out_c

    M = B * N1 * N2
    M_pad = _round_up(M, P)

    x2d = flow_x.reshape(M, H)
    if compute_dtype is not None:
        # Optional bf16 streaming: halves HBM bytes on a BW-bound kernel.
        x2d = x2d.astype(compute_dtype)
        w_blk = w_blk.astype(compute_dtype)
    if M_pad != M:
        # Keep P (full 128-lane density); rows are independent, the zero tail
        # is sliced off after the kernel.
        x2d = jnp.pad(x2d, ((0, M_pad - M), (0, 0)))
    rows = M_pad // P
    x2d = x2d.reshape(rows, Hp)  # metadata reshape, no HBM copy

    # --- row-tile selection --------------------------------------------------
    bytes_el = jnp.dtype(x2d.dtype).itemsize
    row_align = 16 if bytes_el == 2 else 8  # bf16 sublane packing
    # VMEM guard: double-buffered in+out tiles <= ~24 MiB so the config fits
    # every generation's scoped default (incl. v7x 32 MiB scoped / 64 MiB
    # physical) with headroom for the (double-buffered) 64 KiB weight + bias.
    max_tile = (24 * 1024 * 1024) // (2 * (Hp + Op) * bytes_el)
    max_tile = max(row_align, (max_tile // row_align) * row_align)
    tile_m = _choose_tile_m(rows, min(tm, max_tile), _num_tensorcores(), row_align)
    grid_m = pl.cdiv(rows, tile_m)

    out2d = pl.pallas_call(
        _linear_kernel,
        out_shape=jax.ShapeDtypeStruct((rows, Op), x2d.dtype),
        grid_spec=pltpu.PrefetchScalarGridSpec(
            num_scalar_prefetch=0,
            grid=(grid_m,),
            in_specs=[
                pl.BlockSpec((tile_m, Hp), lambda i: (i, 0)),
                # Tiny, constant-index weight/bias: Pallas skips re-fetch when
                # the block index doesn't change between steps.
                pl.BlockSpec((Hp, Op), lambda i: (0, 0)),
                pl.BlockSpec((1, Op), lambda i: (0, 0)),
            ],
            out_specs=pl.BlockSpec((tile_m, Op), lambda i: (i, 0)),
        ),
        compiler_params=pltpu.CompilerParams(
            dimension_semantics=("parallel",)),
    )(x2d, w_blk, b_row)

    # (rows, P*out_c): packed segments along lanes are consecutive rows, so a
    # plain reshape restores row order.
    out_flat = out2d.reshape(M_pad, out_c)
    if M_pad != M:
        out_flat = out_flat[:M]
    return out_flat.reshape(B, N1, N2, out_c)


if __name__ == "__main__":
    # Small shapes consistent with the module: flow_x is [B, N, N, H].
    B, N, H = 2, 8, 32       # in_c = H
    out_c = 32

    key = jax.random.PRNGKey(0)
    k_x, k_w, k_b = jax.random.split(key, 3)

    flow_x = jax.random.normal(k_x, (B, N, N, H), dtype=jnp.float32)

    # Deterministic parameter init (mimics PyTorch Linear's uniform init bounds).
    bound = 1.0 / jnp.sqrt(jnp.float32(H))
    weight = jax.random.uniform(k_w, (out_c, H), jnp.float32, -bound, bound)  # PyTorch layout
    bias = jax.random.uniform(k_b, (out_c,), jnp.float32, -bound, bound)

    # One-time parameter packing (hoisted out of the per-call jitted forward).
    w_blk, b_row = pack_params(weight, bias)

    out = ffnn_t_forward(flow_x, w_blk, b_row)
    out = jax.block_until_ready(out)

    # Sanity check against plain JAX reference.
    ref = flow_x @ weight.T + bias
    assert out.shape == (B, N, N, out_c)
    assert jnp.allclose(out, ref, atol=1e-5, rtol=1e-5)

    print("KERNEL_OK")
</pallas_src>

<mosaic_0001>
module attributes {stable_mosaic.version = 11 : i64} {
  func.func @_linear_kernel(%arg0: i32, %arg1: memref<32x128xf32, #tpu.memory_space<vmem>>, %arg2: memref<128x128xf32, #tpu.memory_space<vmem>>, %arg3: memref<1x128xf32, #tpu.memory_space<vmem>>, %arg4: memref<32x128xf32, #tpu.memory_space<vmem>>) attributes {dimension_semantics = [#tpu.dimension_semantics<parallel>], iteration_bounds = array<i64: 1>, scalar_prefetch = 0 : i64, scratch_operands = 0 : i64, tpu.core_type = #tpu.core_type<tc>, window_params = [{transform_indices = @transform_0, window_bounds = array<i64: 32, 128>}, {pipeline_mode = #tpu.pipeline_mode<synchronous>, transform_indices = @transform_1, window_bounds = array<i64: 128, 128>}, {pipeline_mode = #tpu.pipeline_mode<synchronous>, transform_indices = @transform_2, window_bounds = array<i64: 1, 128>}, {transform_indices = @transform_3, window_bounds = array<i64: 32, 128>}]} {
    %c0 = arith.constant 0 : index
    %c0_0 = arith.constant 0 : index
    %0 = vector.load %arg1[%c0, %c0_0] : memref<32x128xf32, #tpu.memory_space<vmem>>, vector<32x128xf32>
    %c0_1 = arith.constant 0 : index
    %c0_2 = arith.constant 0 : index
    %1 = vector.load %arg2[%c0_1, %c0_2] : memref<128x128xf32, #tpu.memory_space<vmem>>, vector<128x128xf32>
    %cst = arith.constant dense<0.000000e+00> : vector<32x128xf32>
    %2 = tpu.matmul %0, %1, %cst {dimension_numbers = #tpu.dot_dimension_numbers<[1], [0], [0], [1], [0, 0, 1, 1], [], []>} : vector<32x128xf32>, vector<128x128xf32>, vector<32x128xf32> -> vector<32x128xf32>
    %c0_3 = arith.constant 0 : index
    %c0_4 = arith.constant 0 : index
    %3 = vector.load %arg3[%c0_3, %c0_4] : memref<1x128xf32, #tpu.memory_space<vmem>>, vector<1x128xf32>
    %4 = vector.broadcast %3 : vector<1x128xf32> to vector<32x128xf32>
    %5 = arith.addf %2, %4 : vector<32x128xf32>
    %c0_5 = arith.constant 0 : index
    %c0_6 = arith.constant 0 : index
    %6 = vector.load %arg4[%c0_5, %c0_6] : memref<32x128xf32, #tpu.memory_space<vmem>>, vector<32x128xf32>
    tpu.vector_store %arg4[%c0_5, %c0_6], %5 {strides = array<i32>} : memref<32x128xf32, #tpu.memory_space<vmem>>, vector<32x128xf32>,
    return
  }
  func.func @transform_0(%arg0: i32) -> (i32, i32) {
    %c0_i32 = arith.constant 0 : i32
    %c0_i32_0 = arith.constant 0 : i32
    return %arg0, %c0_i32 : i32, i32
  }
  func.func @transform_1(%arg0: i32) -> (i32, i32) {
    %c0_i32 = arith.constant 0 : i32
    %c0_i32_0 = arith.constant 0 : i32
    %c0_i32_1 = arith.constant 0 : i32
    return %c0_i32, %c0_i32_0 : i32, i32
  }
  func.func @transform_2(%arg0: i32) -> (i32, i32) {
    %c0_i32 = arith.constant 0 : i32
    %c0_i32_0 = arith.constant 0 : i32
    %c0_i32_1 = arith.constant 0 : i32
    return %c0_i32, %c0_i32_0 : i32, i32
  }
  func.func @transform_3(%arg0: i32) -> (i32, i32) {
    %c0_i32 = arith.constant 0 : i32
    %c0_i32_0 = arith.constant 0 : i32
    return %arg0, %c0_i32 : i32, i32
  }
}

</mosaic_0001>

<llo_original>
// kernel: ffnn_t_forward.1
$region0: #{ffnn_t_forward.1}
  #allocation0 [shape = 'u32[]', space=smem, size = 0x4, offset = 0x4, fixed_abs, tag = 'smem constant byte address 0x4 - core index']
  #allocation1 [shape = 'u32[72,128]{1,0:T(1,128)}', space=vmem, size = 0x9000, scoped, tag = 'internal scratch']
  %s0 = inlined_call_operand.vmem [shape: f32[32,128], index: 0, kind: input, shape index: {}]
  %s1 = inlined_call_operand.vmem [shape: f32[128,128], index: 1, kind: input, shape index: {}]
  %s2 = inlined_call_operand.vmem [shape: f32[1,128], index: 2, kind: input, shape index: {}]
  %s3 = inlined_call_operand.vmem [shape: f32[32,128], index: 3, kind: output, shape index: {}]
  %s4 = sld [smem:[#allocation0]]
  $region22: #{ffnn_t_forward.1} parent=0
    _
  %s6 = ssub.s32 1, %s4
  %s7 = scalar_select 0, %s6, %s4
  // Predicated region
  $region2: #{ffnn_t_forward.1} parent=0 // pred_check
    _
  $region3: #{ffnn_t_forward.1} parent=0 // pred_check_branch
    %9 = sbr.rel (0) target = $region5
  $region4: #{ffnn_t_forward.1} parent=0 // pred_region
    _
  $region5: #{ffnn_t_forward.1} parent=0 // pred_fallthru
    _
  // Predicated region
  $region6: #{ffnn_t_forward.1} parent=0 // pred_check
    _
  $region7: #{ffnn_t_forward.1} parent=0 // pred_check_branch
    %11 = sbr.rel (0) target = $region9
  $region8: #{ffnn_t_forward.1} parent=0 // pred_region
    _
  $region9: #{ffnn_t_forward.1} parent=0 // pred_fallthru
    _
  // Predicated region
  $region10: #{ffnn_t_forward.1} parent=0 // pred_check
    _
  $region11: #{ffnn_t_forward.1} parent=0 // pred_check_branch
    %13 = sbr.rel (0) target = $region13
  $region12: #{ffnn_t_forward.1} parent=0 // pred_region
    _
  $region13: #{ffnn_t_forward.1} parent=0 // pred_fallthru
    _
  %v14 = vld [vmem:[%s0] sm:$0xff]
  %v15 = vld [vmem:[%s0 + $0x8] sm:$0xff]
  %v16 = vld [vmem:[%s0 + $0x10] sm:$0xff]
  %v17 = vld [vmem:[%s0 + $0x18] sm:$0xff]
  %v18 = vld [vmem:[%s1] sm:$0xff]
  %v19 = vld [vmem:[%s1 + $0x8] sm:$0xff]
  %v20 = vld [vmem:[%s1 + $0x10] sm:$0xff]
  %v21 = vld [vmem:[%s1 + $0x18] sm:$0xff]
  %v22 = vld [vmem:[%s1 + $0x20] sm:$0xff]
  %v23 = vld [vmem:[%s1 + $0x28] sm:$0xff]
  %v24 = vld [vmem:[%s1 + $0x30] sm:$0xff]
  %v25 = vld [vmem:[%s1 + $0x38] sm:$0xff]
  %v26 = vld [vmem:[%s1 + $0x40] sm:$0xff]
  %v27 = vld [vmem:[%s1 + $0x48] sm:$0xff]
  %v28 = vld [vmem:[%s1 + $0x50] sm:$0xff]
  %v29 = vld [vmem:[%s1 + $0x58] sm:$0xff]
  %v30 = vld [vmem:[%s1 + $0x60] sm:$0xff]
  %v31 = vld [vmem:[%s1 + $0x68] sm:$0xff]
  %v32 = vld [vmem:[%s1 + $0x70] sm:$0xff]
  %v33 = vld [vmem:[%s1 + $0x78] sm:$0xff]
  %v34 = vld [vmem:[%s2] sm:$0x1]
  %v36 = vperm.slane %v34, 0
  %38 = vmatpush.msra.mxu0 %v33
  %39 = vmatpush.msra.mxu0 %v32
  %40 = vmatpush.msra.mxu0 %v31
  %41 = vmatpush.msra.mxu0 %v30
  %42 = vmatpush.msra.mxu0 %v29
  %43 = vmatpush.msra.mxu0 %v28
  %44 = vmatpush.msra.mxu0 %v27
  %45 = vmatpush.msra.mxu0 %v26
  %46 = vmatpush.msra.mxu0 %v25
  %47 = vmatpush.msra.mxu0 %v24
  %48 = vmatpush.msra.mxu0 %v23
  %49 = vmatpush.msra.mxu0 %v22
  %50 = vmatpush.msra.mxu0 %v21
  %51 = vmatpush.msra.mxu0 %v20
  %52 = vmatpush.msra.mxu0 %v19
  %53 = vmatpush.msra.mxu0 %v18
  %54 = vmatmul.f32.gmra.mxu0 %v14
  %v55 = vpop.f32.mrf.mxu0
  %v56 = vadd.f32 %v36, %v55
  %57 = vmatmul.f32.gmra.mxu0 %v15
  %v58 = vpop.f32.mrf.mxu0
  %v59 = vadd.f32 %v36, %v58
  %60 = vmatmul.f32.gmra.mxu0 %v16
  %v61 = vpop.f32.mrf.mxu0
  %v62 = vadd.f32 %v36, %v61
  %63 = vmatmul.f32.gmra.mxu0 %v17
  %v64 = vpop.f32.mrf.mxu0
  %v65 = vadd.f32 %v36, %v64
  %66 = vdwg.mxu0
  %67 = vst [vmem:[%s3] sm:$0xff] %v56
  %68 = vst [vmem:[%s3 + $0x8] sm:$0xff] %v59
  %69 = vst [vmem:[%s3 + $0x10] sm:$0xff] %v62
  %70 = vst [vmem:[%s3 + $0x18] sm:$0xff] %v65
  // Predicated region
  $region14: #{ffnn_t_forward.1} parent=0 // pred_check
    _
  $region15: #{ffnn_t_forward.1} parent=0 // pred_check_branch
    %72 = sbr.rel (0) target = $region17
  $region16: #{ffnn_t_forward.1} parent=0 // pred_region
    _
  $region17: #{ffnn_t_forward.1} parent=0 // pred_fallthru
    _
  // Predicated region
  $region18: #{ffnn_t_forward.1} parent=0 // pred_check
    _
  $region19: #{ffnn_t_forward.1} parent=0 // pred_check_branch
    %74 = sbr.rel (0) target = $region21
  $region20: #{ffnn_t_forward.1} parent=0 // pred_region
    _
  $region21: #{ffnn_t_forward.1} parent=0 // pred_fallthru
    _

</llo_original>
